<compile_context>
chip_gen: v7x
topology: tpu7x:2x2x1
jax: 0.10.0
libtpu: 0.0.40
codegen_flags: <defaults>
</compile_context>

<pallas_src>
import jax
import jax.numpy as jnp
from jax import lax
from jax.experimental import pallas as pl
from jax.experimental.pallas import tpu as pltpu


def _normalized_error_kernel(pred_ref, true_ref, sel_ref, out_ref, num_acc, den_acc):
    # pred_ref / true_ref : (block_b, block_lane) in the input dtype (upcast here)
    # sel_ref             : (block_lane, 128) f32 one-hot channel selector
    # out_ref             : (block_b, 128) f32 per-row ratio, lanes 0/1 = v/sh
    # num_acc / den_acc   : (block_b, 128) f32 accumulators across lane chunks
    k = pl.program_id(1)

    @pl.when(k == 0)
    def _init():
        num_acc[...] = jnp.zeros_like(num_acc)
        den_acc[...] = jnp.zeros_like(den_acc)

    xf = pred_ref[...].astype(jnp.float32)
    yf = true_ref[...].astype(jnp.float32)
    sel = sel_ref[...]
    d = xf - yf

    # Channel-masked sums of squares on the MXU (frees the VPU slots).
    # HIGHEST keeps full f32 accuracy for the f32 x f32 contraction.
    num_acc[...] += jnp.dot(d * d, sel, preferred_element_type=jnp.float32,
                            precision=lax.Precision.HIGHEST)
    den_acc[...] += jnp.dot(yf * yf, sel, preferred_element_type=jnp.float32,
                            precision=lax.Precision.HIGHEST)

    @pl.when(k == pl.num_programs(1) - 1)
    def _finalize():
        # ||diff|| / ||true||  via sqrt * rsqrt (EUP slot, no vector divide).
        # Lanes >= C have 0/0 -> NaN; they are discarded by the wrapper.
        out_ref[...] = jnp.sqrt(num_acc[...]) * lax.rsqrt(den_acc[...])


def normalized_error(y_pred, y_true, *, block_b=None, block_lane=None):
    """y_pred, y_true: [B, T, C] floats (any float dtype). Returns (e_v, e_sh) scalars."""
    assert y_pred.shape == y_true.shape
    B, T, C = y_pred.shape
    assert C >= 2
    lane = T * C
    itemsize = jnp.dtype(y_pred.dtype).itemsize

    # Free, contiguous reshape: no HBM relayout, channels stay interleaved on lanes.
    pred_flat = y_pred.reshape(B, lane)
    true_flat = y_true.reshape(B, lane)

    # One-hot channel selector (lane, 128): column c = 1 where lane_idx % C == c.
    # Constant-folded under jit; resident in VMEM across the grid.
    chan = (jnp.arange(lane, dtype=jnp.int32) % C)[:, None]     # (lane, 1)
    cols = jnp.arange(128, dtype=jnp.int32)[None, :]            # (1, 128)
    sel = (chan == cols).astype(jnp.float32)                    # (lane, 128)

    # ---- VMEM-budgeted tiling ---------------------------------------------
    # Default scoped VMEM is only ~16/32/32 MiB (v5e/v6e/v7x); request 48 MiB
    # explicitly and budget tiles against ~75% of it.  Live bytes per streamed
    # element position:
    #   2 inputs x 2 pipeline buffers x itemsize            (input DMA tiles)
    # + ~12 B of in-kernel f32 temporaries (diff, diff^2, true^2)
    vmem_limit = 48 * 1024 * 1024
    per_elem = 4 * itemsize + 12
    max_block_elems = max(8 * 128, int(vmem_limit * 0.75) // per_elem)

    # Lane (reduction) axis chunking: only chunk when lane is a multiple of 128
    # and a chunk divides lane exactly (avoids ragged-lane garbage in the sums).
    if block_lane is None:
        if 8 * lane <= max_block_elems or lane % 128 != 0:
            # TODO(synk): support huge T*C that is not a multiple of 128 by
            # masking the ragged lane chunk inside the kernel.
            block_lane = lane
        else:
            groups = lane // 128
            best = 1
            for dd in range(1, groups + 1):
                if groups % dd == 0 and 8 * 128 * dd <= max_block_elems:
                    best = dd
            block_lane = 128 * best
    assert block_lane == lane or (lane % block_lane == 0 and block_lane % 128 == 0)

    # Batch tile: largest sublane-aligned tile fitting the budget.
    if block_b is None:
        block_b = max(8, (max_block_elems // max(1, block_lane)) // 8 * 8)
    if block_b >= B:
        block_b = B                              # single full-dim block (always legal)
    else:
        block_b = max(8, (block_b // 8) * 8)     # (8,128)-rule: multiple of 8

    grid = (pl.cdiv(B, block_b), pl.cdiv(lane, block_lane))

    cost = pl.CostEstimate(
        flops=2 * 2 * B * lane * 128 + 5 * B * lane,
        transcendentals=2 * B * 128,
        bytes_accessed=2 * B * lane * itemsize + lane * 128 * 4 + B * 128 * 4,
    )

    ratios = pl.pallas_call(
        _normalized_error_kernel,
        out_shape=jax.ShapeDtypeStruct((B, 128), jnp.float32),
        grid=grid,
        in_specs=[
            pl.BlockSpec((block_b, block_lane), lambda i, k: (i, k)),
            pl.BlockSpec((block_b, block_lane), lambda i, k: (i, k)),
            pl.BlockSpec((block_lane, 128), lambda i, k: (k, 0)),
        ],
        out_specs=pl.BlockSpec((block_b, 128), lambda i, k: (i, 0)),
        scratch_shapes=[
            pltpu.VMEM((block_b, 128), jnp.float32),   # num_sq accumulator
            pltpu.VMEM((block_b, 128), jnp.float32),   # den_sq accumulator
        ],
        compiler_params=pltpu.CompilerParams(
            dimension_semantics=("parallel", "arbitrary"),
            vmem_limit_bytes=vmem_limit,
        ),
        cost_estimate=cost,
    )(pred_flat, true_flat, sel)

    # Tiny final reduction: mean over the global batch; lanes 0/1 = channels v/sh.
    e = jnp.mean(ratios[:, :2], axis=0)
    return e[0], e[1]


def _reference(y_pred, y_true):
    pred_sh = y_pred[:, :, 1]
    true_sh = y_true[:, :, 1]
    pred_v = y_pred[:, :, 0]
    true_v = y_true[:, :, 0]
    num_sh = jnp.linalg.norm(pred_sh - true_sh, axis=1)
    num_v = jnp.linalg.norm(pred_v - true_v, axis=1)
    den_sh = jnp.linalg.norm(true_sh, axis=1)
    den_v = jnp.linalg.norm(true_v, axis=1)
    return jnp.mean(num_v / den_v), jnp.mean(num_sh / den_sh)


if __name__ == "__main__":
    key = jax.random.PRNGKey(0)
    f = jax.jit(normalized_error, static_argnames=("block_b", "block_lane"))

    def check(y_pred, y_true, **kw):
        e_v, e_sh = f(y_pred, y_true, **kw)
        jax.block_until_ready((e_v, e_sh))
        ref_v, ref_sh = _reference(y_pred, y_true)
        # HIGHEST-precision MXU path is ~1e-6 accurate; keep slack for pass variation.
        assert jnp.allclose(e_v, ref_v, rtol=1e-3, atol=1e-3), (e_v, ref_v)
        assert jnp.allclose(e_sh, ref_sh, rtol=1e-3, atol=1e-3), (e_sh, ref_sh)

    # Case 1: multi-block batch grid with a ragged last block (20 % 8 != 0).
    B, T, C = 20, 32, 2
    k1, k2, key = jax.random.split(key, 3)
    check(jax.random.normal(k1, (B, T, C), dtype=jnp.float32),
          jax.random.normal(k2, (B, T, C), dtype=jnp.float32), block_b=8)

    # Case 2: single-block path, small B (< 8) and extra unused channels (C > 2).
    B, T, C = 6, 16, 3
    k1, k2, key = jax.random.split(key, 3)
    check(jax.random.normal(k1, (B, T, C), dtype=jnp.float32),
          jax.random.normal(k2, (B, T, C), dtype=jnp.float32))

    # Case 3: exercise the lane-reduction grid axis (accumulator init/finalize).
    B, T, C = 16, 128, 2
    k1, k2, key = jax.random.split(key, 3)
    check(jax.random.normal(k1, (B, T, C), dtype=jnp.float32),
          jax.random.normal(k2, (B, T, C), dtype=jnp.float32),
          block_b=8, block_lane=128)

    print("KERNEL_OK")
</pallas_src>

<mosaic_0001>
module attributes {stable_mosaic.version = 11 : i64} {
  func.func @_normalized_error_kernel(%arg0: i32, %arg1: i32, %arg2: memref<8x64xf32, #tpu.memory_space<vmem>>, %arg3: memref<8x64xf32, #tpu.memory_space<vmem>>, %arg4: memref<64x128xf32, #tpu.memory_space<vmem>>, %arg5: memref<8x128xf32, #tpu.memory_space<vmem>>, %arg6: memref<8x128xf32, #tpu.memory_space<vmem>>, %arg7: memref<8x128xf32, #tpu.memory_space<vmem>>) attributes {dimension_semantics = [#tpu.dimension_semantics<parallel>, #tpu.dimension_semantics<arbitrary>], iteration_bounds = array<i64: 3, 1>, scalar_prefetch = 0 : i64, scratch_operands = 2 : i64, tpu.core_type = #tpu.core_type<tc>, window_params = [{transform_indices = @transform_0, window_bounds = array<i64: 8, 64>}, {transform_indices = @transform_1, window_bounds = array<i64: 8, 64>}, {transform_indices = @transform_2, window_bounds = array<i64: 64, 128>}, {transform_indices = @transform_3, window_bounds = array<i64: 8, 128>}]} {
    %c0_i32 = arith.constant 0 : i32
    %0 = arith.cmpi eq, %arg1, %c0_i32 : i32
    %1 = arith.extui %0 : i1 to i32
    %c0_i32_0 = arith.constant 0 : i32
    %2 = arith.cmpi ne, %1, %c0_i32_0 : i32
    scf.if %2 {
      %cst_17 = arith.constant 0.000000e+00 : f32
      %20 = vector.broadcast %cst_17 : f32 to vector<8x128xf32>
      %c0_18 = arith.constant 0 : index
      %c0_19 = arith.constant 0 : index
      %21 = vector.load %arg6[%c0_18, %c0_19] : memref<8x128xf32, #tpu.memory_space<vmem>>, vector<8x128xf32>
      tpu.vector_store %arg6[%c0_18, %c0_19], %20 {strides = array<i32>} : memref<8x128xf32, #tpu.memory_space<vmem>>, vector<8x128xf32>,
      %cst_20 = arith.constant 0.000000e+00 : f32
      %22 = vector.broadcast %cst_20 : f32 to vector<8x128xf32>
      %c0_21 = arith.constant 0 : index
      %c0_22 = arith.constant 0 : index
      %23 = vector.load %arg7[%c0_21, %c0_22] : memref<8x128xf32, #tpu.memory_space<vmem>>, vector<8x128xf32>
      tpu.vector_store %arg7[%c0_21, %c0_22], %22 {strides = array<i32>} : memref<8x128xf32, #tpu.memory_space<vmem>>, vector<8x128xf32>,
    } else {
    }
    %c0 = arith.constant 0 : index
    %c0_1 = arith.constant 0 : index
    %3 = vector.load %arg2[%c0, %c0_1] : memref<8x64xf32, #tpu.memory_space<vmem>>, vector<8x64xf32>
    %c0_2 = arith.constant 0 : index
    %c0_3 = arith.constant 0 : index
    %4 = vector.load %arg3[%c0_2, %c0_3] : memref<8x64xf32, #tpu.memory_space<vmem>>, vector<8x64xf32>
    %c0_4 = arith.constant 0 : index
    %c0_5 = arith.constant 0 : index
    %5 = vector.load %arg4[%c0_4, %c0_5] : memref<64x128xf32, #tpu.memory_space<vmem>>, vector<64x128xf32>
    %6 = arith.subf %3, %4 : vector<8x64xf32>
    %c0_6 = arith.constant 0 : index
    %c0_7 = arith.constant 0 : index
    %7 = vector.load %arg6[%c0_6, %c0_7] : memref<8x128xf32, #tpu.memory_space<vmem>>, vector<8x128xf32>
    %8 = arith.mulf %6, %6 : vector<8x64xf32>
    %cst = arith.constant dense<0.000000e+00> : vector<8x128xf32>
    %9 = tpu.matmul %8, %5, %cst {dimension_numbers = #tpu.dot_dimension_numbers<[1], [0], [0], [1], [0, 0, 1, 1], [], []>, precision = #tpu.contract_precision<fp32>} : vector<8x64xf32>, vector<64x128xf32>, vector<8x128xf32> -> vector<8x128xf32>
    %10 = arith.addf %7, %9 : vector<8x128xf32>
    %c0_8 = arith.constant 0 : index
    %c0_9 = arith.constant 0 : index
    %11 = vector.load %arg6[%c0_8, %c0_9] : memref<8x128xf32, #tpu.memory_space<vmem>>, vector<8x128xf32>
    tpu.vector_store %arg6[%c0_8, %c0_9], %10 {strides = array<i32>} : memref<8x128xf32, #tpu.memory_space<vmem>>, vector<8x128xf32>,
    %c0_10 = arith.constant 0 : index
    %c0_11 = arith.constant 0 : index
    %12 = vector.load %arg7[%c0_10, %c0_11] : memref<8x128xf32, #tpu.memory_space<vmem>>, vector<8x128xf32>
    %13 = arith.mulf %4, %4 : vector<8x64xf32>
    %cst_12 = arith.constant dense<0.000000e+00> : vector<8x128xf32>
    %14 = tpu.matmul %13, %5, %cst_12 {dimension_numbers = #tpu.dot_dimension_numbers<[1], [0], [0], [1], [0, 0, 1, 1], [], []>, precision = #tpu.contract_precision<fp32>} : vector<8x64xf32>, vector<64x128xf32>, vector<8x128xf32> -> vector<8x128xf32>
    %15 = arith.addf %12, %14 : vector<8x128xf32>
    %c0_13 = arith.constant 0 : index
    %c0_14 = arith.constant 0 : index
    %16 = vector.load %arg7[%c0_13, %c0_14] : memref<8x128xf32, #tpu.memory_space<vmem>>, vector<8x128xf32>
    tpu.vector_store %arg7[%c0_13, %c0_14], %15 {strides = array<i32>} : memref<8x128xf32, #tpu.memory_space<vmem>>, vector<8x128xf32>,
    %c0_i32_15 = arith.constant 0 : i32
    %17 = arith.cmpi eq, %arg1, %c0_i32_15 : i32
    %18 = arith.extui %17 : i1 to i32
    %c0_i32_16 = arith.constant 0 : i32
    %19 = arith.cmpi ne, %18, %c0_i32_16 : i32
    scf.if %19 {
      %c0_17 = arith.constant 0 : index
      %c0_18 = arith.constant 0 : index
      %20 = vector.load %arg6[%c0_17, %c0_18] : memref<8x128xf32, #tpu.memory_space<vmem>>, vector<8x128xf32>
      %21 = math.sqrt %20 : vector<8x128xf32>
      %c0_19 = arith.constant 0 : index
      %c0_20 = arith.constant 0 : index
      %22 = vector.load %arg7[%c0_19, %c0_20] : memref<8x128xf32, #tpu.memory_space<vmem>>, vector<8x128xf32>
      %23 = math.rsqrt %22 : vector<8x128xf32>
      %24 = arith.mulf %21, %23 : vector<8x128xf32>
      %c0_21 = arith.constant 0 : index
      %c0_22 = arith.constant 0 : index
      %25 = vector.load %arg5[%c0_21, %c0_22] : memref<8x128xf32, #tpu.memory_space<vmem>>, vector<8x128xf32>
      tpu.vector_store %arg5[%c0_21, %c0_22], %24 {strides = array<i32>} : memref<8x128xf32, #tpu.memory_space<vmem>>, vector<8x128xf32>,
    } else {
    }
    return
  }
  func.func @transform_0(%arg0: i32, %arg1: i32) -> (i32, i32) {
    %c0_i32 = arith.constant 0 : i32
    return %arg0, %arg1 : i32, i32
  }
  func.func @transform_1(%arg0: i32, %arg1: i32) -> (i32, i32) {
    %c0_i32 = arith.constant 0 : i32
    return %arg0, %arg1 : i32, i32
  }
  func.func @transform_2(%arg0: i32, %arg1: i32) -> (i32, i32) {
    %c0_i32 = arith.constant 0 : i32
    %c0_i32_0 = arith.constant 0 : i32
    return %arg1, %c0_i32 : i32, i32
  }
  func.func @transform_3(%arg0: i32, %arg1: i32) -> (i32, i32) {
    %c0_i32 = arith.constant 0 : i32
    %c0_i32_0 = arith.constant 0 : i32
    return %arg0, %c0_i32 : i32, i32
  }
}

</mosaic_0001>

<llo_original>
// kernel: normalized_error.1
$region0: #{normalized_error.1}
  #allocation0 [shape = 'u32[]', space=smem, size = 0x4, offset = 0x4, fixed_abs, tag = 'smem constant byte address 0x4 - core index']
  #allocation1 [shape = 'u32[144,128]{1,0:T(1,128)}', space=vmem, size = 0x12000, scoped, tag = 'internal scratch']
  #allocation2 [shape = 'f32[8,128]{1,0:T(8,128)}', space=vmem, size = 0x1000, scoped, tag = 'scratch operand']
  #allocation3 [shape = 'f32[8,128]{1,0:T(8,128)}', space=vmem, size = 0x1000, scoped, tag = 'scratch operand']
  %s0 = inlined_call_operand.vmem [shape: f32[20,64], index: 0, kind: input, shape index: {}]
  %s1 = inlined_call_operand.vmem [shape: f32[20,64], index: 1, kind: input, shape index: {}]
  %s2 = inlined_call_operand.vmem [shape: f32[64,128], index: 2, kind: input, shape index: {}]
  %s3 = inlined_call_operand.vmem [shape: f32[20,128], index: 3, kind: output, shape index: {}]
  %s4 = sld [smem:[#allocation0]]
  $region53: #{normalized_error.1} parent=0
    _
  %s6 = ssub.s32 1, %s4
  %s7 = scalar_select 0, %s6, %s4
  loop: start=0, step=1, limit=5
  $region2: #{normalized_error.1} parent=0 // loop_pre_header
    _
  $region3: #{normalized_error.1} parent=0 // loop_header
    %s9 = sphi 0, %s13
    %p10 = scmp.ge.s32.totalorder %s9, 5
    %s16 = sphi 0, %s28
    %s17 = sphi 0, %s24
    %s18 = sphi 0, %s16
    %s19 = sphi 0, %s17
    %s20 = sphi 0, %s18
    %s21 = sphi 0, %s19
    %s33 = sphi 0, %s35
    %s36 = sphi 0, %s33
    %s37 = sphi 0, %s36
    %s53 = sphi 0, %s37
    %s61 = sphi 0, %s63
    %s64 = sphi 0, %s61
    %s65 = sphi 0, %s64
    %s81 = sphi 0, %s65
    %s87 = sphi 0, %s89
    %s90 = sphi 0, %s87
    %s91 = sphi 0, %s90
    %s107 = sphi 0, %s91
    %s113 = sphi 0, %s115
    %s116 = sphi 0, %s113
    %s117 = sphi 0, %s116
    %s133 = sphi 0, %s117
  $region4: #{normalized_error.1} parent=0 // loop_header_branch
    %12 = sbr.rel (%p10) target = $region8
  $region5: #{normalized_error.1} parent=0 // loop_body
    %s14 = ssub.s32 %s9, 1
    %s15 = ssub.s32 %s9, 2
    %s22 = sadd.s32 1, %s17
    %p23 = scmp.ge.s32.totalorder %s22, 1
    %s24 = scalar_select %p23, 0, %s22
    %s25 = sadd.s32 1, %s16
    %s26 = scalar_select %p23, %s25, %s16
    %p27 = scmp.ge.s32.totalorder %s26, 3
    %s28 = scalar_select %p27, 0, %s26
    %s29 = ssub.s32 %s16, %s28
    %s30 = ssub.s32 %s17, %s24
    %s31 = sor.u32 %s29, %s30
    %p32 = scmp.eq.s32.totalorder %s31, 0
    %s34 = sadd.s32 %s33, 1
    %s35 = scalar_select %p32, %s33, %s34
    %p38 = pneg %p32
    %p39 = scmp.eq.s32.totalorder %s9, 2
    %p40 = por %p38, %p39
    %p41 = scmp.ne.s32.totalorder %s33, %s36
    %p42 = scmp.eq.s32.totalorder %s9, 0
    %p43 = por %p41, %p42
    %p44 = scmp.ne.s32.totalorder %s33, %s36
    %p45 = scmp.eq.s32.totalorder %s14, 2
    %p46 = por %p44, %p45
    %p47 = scmp.ne.s32.totalorder %s36, %s37
    %p48 = scmp.eq.s32.totalorder %s14, 0
    %p49 = por %p47, %p48
    %p50 = scmp.ne.s32.totalorder %s36, %s37
    %p51 = scmp.eq.s32.totalorder %s15, 2
    %p52 = por %p50, %p51
    %p54 = scmp.ne.s32.totalorder %s37, %s53
    %p55 = scmp.eq.s32.totalorder %s15, 0
    %p56 = por %p54, %p55
    %s57 = ssub.s32 %s16, %s28
    %s58 = ssub.s32 %s17, %s24
    %s59 = sor.u32 %s57, %s58
    %p60 = scmp.eq.s32.totalorder %s59, 0
    %s62 = sadd.s32 %s61, 1
    %s63 = scalar_select %p60, %s61, %s62
    %p66 = pneg %p60
    %p67 = scmp.eq.s32.totalorder %s9, 2
    %p68 = por %p66, %p67
    %p69 = scmp.ne.s32.totalorder %s61, %s64
    %p70 = scmp.eq.s32.totalorder %s9, 0
    %p71 = por %p69, %p70
    %p72 = scmp.ne.s32.totalorder %s61, %s64
    %p73 = scmp.eq.s32.totalorder %s14, 2
    %p74 = por %p72, %p73
    %p75 = scmp.ne.s32.totalorder %s64, %s65
    %p76 = scmp.eq.s32.totalorder %s14, 0
    %p77 = por %p75, %p76
    %p78 = scmp.ne.s32.totalorder %s64, %s65
    %p79 = scmp.eq.s32.totalorder %s15, 2
    %p80 = por %p78, %p79
    %p82 = scmp.ne.s32.totalorder %s65, %s81
    %p83 = scmp.eq.s32.totalorder %s15, 0
    %p84 = por %p82, %p83
    %s85 = ssub.s32 %s17, %s24
    %p86 = scmp.eq.s32.totalorder %s85, 0
    %s88 = sadd.s32 %s87, 1
    %s89 = scalar_select %p86, %s87, %s88
    %p92 = pneg %p86
    %p93 = scmp.eq.s32.totalorder %s9, 2
    %p94 = por %p92, %p93
    %p95 = scmp.ne.s32.totalorder %s87, %s90
    %p96 = scmp.eq.s32.totalorder %s9, 0
    %p97 = por %p95, %p96
    %p98 = scmp.ne.s32.totalorder %s87, %s90
    %p99 = scmp.eq.s32.totalorder %s14, 2
    %p100 = por %p98, %p99
    %p101 = scmp.ne.s32.totalorder %s90, %s91
    %p102 = scmp.eq.s32.totalorder %s14, 0
    %p103 = por %p101, %p102
    %p104 = scmp.ne.s32.totalorder %s90, %s91
    %p105 = scmp.eq.s32.totalorder %s15, 2
    %p106 = por %p104, %p105
    %p108 = scmp.ne.s32.totalorder %s91, %s107
    %p109 = scmp.eq.s32.totalorder %s15, 0
    %p110 = por %p108, %p109
    %s111 = ssub.s32 %s16, %s28
    %p112 = scmp.eq.s32.totalorder %s111, 0
    %s114 = sadd.s32 %s113, 1
    %s115 = scalar_select %p112, %s113, %s114
    %p118 = pneg %p112
    %p119 = scmp.eq.s32.totalorder %s9, 2
    %p120 = por %p118, %p119
    %p121 = scmp.ne.s32.totalorder %s113, %s116
    %p122 = scmp.eq.s32.totalorder %s9, 0
    %p123 = por %p121, %p122
    %p124 = scmp.ne.s32.totalorder %s113, %s116
    %p125 = scmp.eq.s32.totalorder %s14, 2
    %p126 = por %p124, %p125
    %p127 = scmp.ne.s32.totalorder %s116, %s117
    %p128 = scmp.eq.s32.totalorder %s14, 0
    %p129 = por %p127, %p128
    %p130 = scmp.ne.s32.totalorder %s116, %s117
    %p131 = scmp.eq.s32.totalorder %s15, 2
    %p132 = por %p130, %p131
    %p134 = scmp.ne.s32.totalorder %s117, %s133
    %p135 = scmp.eq.s32.totalorder %s15, 0
    %p136 = por %p134, %p135
    %p137 = scmp.le.s32.totalorder 1, %s9
    %p138 = scmp.lt.s32.totalorder %s9, 4
    %p139 = pnand %p137, %p138
    %p140 = pneg %p139
    // Predicated region
    $region9: #{normalized_error.1} parent=5 // pred_check
      _
    $region10: #{normalized_error.1} parent=5 // pred_check_branch
      %142 = sbr.rel (%p139) target = $region12
    $region11: #{normalized_error.1} parent=5 // pred_region
      %s143 = ssub.s32 %s9, 1
      // Predicated region
      $region13: #{normalized_error.1} parent=11 // pred_check
        %p144 = pneg %p103
      $region14: #{normalized_error.1} parent=11 // pred_check_branch
        %146 = sbr.rel (%p144) target = $region16
      $region15: #{normalized_error.1} parent=11 // pred_region
        %s147 = smul.u32 8, %s19
        %p148 = scmp.lt.s32.totalorder %s147, 7
        %s149 = scalar_select %p148, %s147, 7
        %s150 = smul.addr %s149, 8
        %s151 = scalar_lea.vmem %s2, %s150
        %s152 = smul.u32 8, %s19
      $region16: #{normalized_error.1} parent=11 // pred_fallthru
        _
    $region12: #{normalized_error.1} parent=5 // pred_fallthru
      _
    %p153 = scmp.lt.s32.totalorder %s9, 3
    // Predicated region
    $region17: #{normalized_error.1} parent=5 // pred_check
      %p154 = pneg %p153
    $region18: #{normalized_error.1} parent=5 // pred_check_branch
      %156 = sbr.rel (%p154) target = $region20
    $region19: #{normalized_error.1} parent=5 // pred_region
      // Predicated region
      $region21: #{normalized_error.1} parent=19 // pred_check
        %p157 = pneg %p43
      $region22: #{normalized_error.1} parent=19 // pred_check_branch
        %159 = sbr.rel (%p157) target = $region24
      $region23: #{normalized_error.1} parent=19 // pred_region
        %p160 = scmp.lt.s32.totalorder %s16, 2
        %s161 = scalar_select %p160, %s16, 2
        %p162 = scmp.lt.s32.totalorder %s17, 0
        %s163 = scalar_select %p162, %s17, 0
        %s164 = sadd.s32 %s163, %s161
        %s165 = smul.addr %s164, 8
        %s166 = scalar_lea.vmem %s0, %s165
      $region24: #{normalized_error.1} parent=19 // pred_fallthru
        _
      // Predicated region
      $region25: #{normalized_error.1} parent=19 // pred_check
        %p167 = pneg %p71
      $region26: #{normalized_error.1} parent=19 // pred_check_branch
        %169 = sbr.rel (%p167) target = $region28
      $region27: #{normalized_error.1} parent=19 // pred_region
        %p170 = scmp.lt.s32.totalorder %s16, 2
        %s171 = scalar_select %p170, %s16, 2
        %p172 = scmp.lt.s32.totalorder %s17, 0
        %s173 = scalar_select %p172, %s17, 0
        %s174 = sadd.s32 %s173, %s171
        %s175 = smul.addr %s174, 8
        %s176 = scalar_lea.vmem %s1, %s175
      $region28: #{normalized_error.1} parent=19 // pred_fallthru
        _
    $region20: #{normalized_error.1} parent=5 // pred_fallthru
      _
    %p177 = scmp.le.s32.totalorder 1, %s9
    %p178 = scmp.lt.s32.totalorder %s9, 4
    %p179 = pnand %p177, %p178
    %p180 = pneg %p179
    // Predicated region
    $region29: #{normalized_error.1} parent=5 // pred_check
      _
    $region30: #{normalized_error.1} parent=5 // pred_check_branch
      %182 = sbr.rel (%p179) target = $region32
    $region31: #{normalized_error.1} parent=5 // pred_region
      %s183 = ssub.s32 %s9, 1
      %p184 = scmp.lt.s32.totalorder %s18, 2
      %s185 = scalar_select %p184, %s18, 2
      %p186 = scmp.lt.s32.totalorder %s19, 0
      %s187 = scalar_select %p186, %s19, 0
      %s188 = sadd.s32 %s187, %s185
      %s189 = smul.addr %s188, 8
      %s190 = scalar_lea.vmem %s0, %s189
      %p191 = pneg %p49
      %p192 = pneg %p46
      %p193 = scmp.lt.s32.totalorder %s18, 2
      %s194 = scalar_select %p193, %s18, 2
      %p195 = scmp.lt.s32.totalorder %s19, 0
      %s196 = scalar_select %p195, %s19, 0
      %s197 = sadd.s32 %s196, %s194
      %s198 = smul.addr %s197, 8
      %s199 = scalar_lea.vmem %s1, %s198
      %p200 = pneg %p77
      %p201 = pneg %p74
      %s202 = smul.u32 8, %s19
      %p203 = scmp.lt.s32.totalorder %s202, 7
      %s204 = scalar_select %p203, %s202, 7
      %s205 = smul.addr %s204, 8
      %s206 = scalar_lea.vmem %s2, %s205
      %p207 = pneg %p103
      %p208 = pneg %p100
      %p209 = pneg %p129
      %p210 = pneg %p126
      %p211 = scmp.lt.s32.totalorder %s18, 2
      %s212 = scalar_select %p211, %s18, 2
      %s213 = smul.addr %s212, 8
      %s214 = scalar_lea.vmem %s3, %s213
      %p215 = scmp.lt.s32.totalorder %s18, 2
      %s216 = scalar_select %p215, %s18, 2
      %p217 = scmp.lt.s32.totalorder %s19, 0
      %s218 = scalar_select %p217, %s19, 0
      %s219 = sadd.s32 %s218, %s216
      %s220 = smul.addr %s219, 8
      %s221 = scalar_lea.vmem %s0, %s220
      %p222 = scmp.lt.s32.totalorder %s18, 2
      %s223 = scalar_select %p222, %s18, 2
      %p224 = scmp.lt.s32.totalorder %s19, 0
      %s225 = scalar_select %p224, %s19, 0
      %s226 = sadd.s32 %s225, %s223
      %s227 = smul.addr %s226, 8
      %s228 = scalar_lea.vmem %s1, %s227
      %s229 = smul.u32 8, %s19
      %p230 = scmp.lt.s32.totalorder %s229, 7
      %s231 = scalar_select %p230, %s229, 7
      %s232 = smul.addr %s231, 8
      %s233 = scalar_lea.vmem %s2, %s232
      %s234 = smul.u32 8, %s19
      %p235 = scmp.lt.s32.totalorder %s18, 2
      %s236 = scalar_select %p235, %s18, 2
      %s237 = smul.addr %s236, 8
      %s238 = scalar_lea.vmem %s3, %s237
      %p239 = scmp.eq.s32.totalorder %s19, 0
      // Predicated region
      $region33: #{normalized_error.1} parent=31 // pred_check
        %p240 = pneg %p239
      $region34: #{normalized_error.1} parent=31 // pred_check_branch
        %242 = sbr.rel (%p240) target = $region36
      $region35: #{normalized_error.1} parent=31 // pred_region
        %243 = vst [vmem:[#allocation2] sm:$0xff] 0.0
        %244 = vst [vmem:[#allocation3] sm:$0xff] 0.0
      $region36: #{normalized_error.1} parent=31 // pred_fallthru
        _
      %v245 = vld [vmem:[%s221] sm:$0xff]
      %v246 = vld [vmem:[%s228] sm:$0xff]
      %v247 = vld [vmem:[%s233] sm:$0xff]
      %v248 = vld [vmem:[%s233 + $0x8] sm:$0xff]
      %v249 = vld [vmem:[%s233 + $0x10] sm:$0xff]
      %v250 = vld [vmem:[%s233 + $0x18] sm:$0xff]
      %v251 = vld [vmem:[%s233 + $0x20] sm:$0xff]
      %v252 = vld [vmem:[%s233 + $0x28] sm:$0xff]
      %v253 = vld [vmem:[%s233 + $0x30] sm:$0xff]
      %v254 = vld [vmem:[%s233 + $0x38] sm:$0xff]
      %v255 = vsub.f32 %v245, %v246
      %v256 = vld [vmem:[#allocation2] sm:$0xff]
      %v257 = vmul.f32 %v255, %v255
      %vm258 = vcmask 523264
      %v260 = vsel %vm258, %v257, 0
      %262 = vmatprep.subr.mxu0 0.0
      %v263 = vand.u32 %v247, 4294901760
      %264 = vmatpush1.msra.mxu0 %v263
      %265 = vmatprep.subr.mxu0 0.0
      %v266 = vand.u32 %v248, 4294901760
      %267 = vmatpush1.msra.mxu0 %v266
      %268 = vmatprep.subr.mxu0 0.0
      %v269 = vand.u32 %v249, 4294901760
      %270 = vmatpush1.msra.mxu0 %v269
      %271 = vmatprep.subr.mxu0 0.0
      %v272 = vand.u32 %v250, 4294901760
      %273 = vmatpush1.msra.mxu0 %v272
      %274 = vmatprep.subr.mxu0 0.0
      %v275 = vand.u32 %v251, 4294901760
      %276 = vmatpush1.msra.mxu0 %v275
      %277 = vmatprep.subr.mxu0 0.0
      %v278 = vand.u32 %v252, 4294901760
      %279 = vmatpush1.msra.mxu0 %v278
      %280 = vmatprep.subr.mxu0 0.0
      %v281 = vand.u32 %v253, 4294901760
      %282 = vmatpush1.msra.mxu0 %v281
      %283 = vmatprep.subr.mxu0 0.0
      %v284 = vand.u32 %v254, 4294901760
      %285 = vmatpush1.msra.mxu0 %v284
      %286 = vmatprep.subr.mxu0 0.0
      %287 = vmatpush1.msra.mxu0 0.0
      %288 = vmatprep.subr.mxu0 0.0
      %289 = vmatpush1.msra.mxu0 0.0
      %290 = vmatprep.subr.mxu0 0.0
      %291 = vmatpush1.msra.mxu0 0.0
      %292 = vmatprep.subr.mxu0 0.0
      %293 = vmatpush1.msra.mxu0 0.0
      %294 = vmatprep.subr.mxu0 0.0
      %295 = vmatpush1.msra.mxu0 0.0
      %296 = vmatprep.subr.mxu0 0.0
      %297 = vmatpush1.msra.mxu0 0.0
      %298 = vmatprep.subr.mxu0 0.0
      %299 = vmatpush1.msra.mxu0 0.0
      %300 = vmatprep.subr.mxu0 0.0
      %301 = vmatpush1.msra.mxu0 0.0
      %302 = vmatprep.subr.mxu0 0.0
      %303 = vmatpush1.msra.mxu0 0.0
      %304 = vmatprep.subr.mxu0 0.0
      %305 = vmatpush1.msra.mxu0 0.0
      %306 = vmatprep.subr.mxu0 0.0
      %307 = vmatpush1.msra.mxu0 0.0
      %308 = vmatprep.subr.mxu0 0.0
      %309 = vmatpush1.msra.mxu0 0.0
      %310 = vmatprep.subr.mxu0 0.0
      %311 = vmatpush1.msra.mxu0 0.0
      %312 = vmatprep.subr.mxu0 0.0
      %313 = vmatpush1.msra.mxu0 0.0
      %314 = vmatprep.subr.mxu0 0.0
      %315 = vmatpush1.msra.mxu0 0.0
      %316 = vmatprep.subr.mxu0 0.0
      %317 = vmatpush1.msra.mxu0 0.0
      %318 = vmatprep.subr.mxu0 0.0
      %319 = vmatpush1.msra.mxu0 0.0
      %320 = vmatprep.subr.mxu0 0.0
      %321 = vmatpush1.msra.mxu0 0.0
      %322 = vmatprep.subr.mxu0 0.0
      %323 = vmatpush1.msra.mxu0 0.0
      %324 = vmatprep.subr.mxu0 0.0
      %325 = vmatpush1.msra.mxu0 0.0
      %326 = vmatprep.subr.mxu0 0.0
      %327 = vmatpush1.msra.mxu0 0.0
      %328 = vmatprep.subr.mxu0 0.0
      %329 = vmatpush1.msra.mxu0 0.0
      %330 = vmatprep.subr.mxu0 0.0
      %331 = vmatpush1.msra.mxu0 0.0
      %332 = vmatprep.subr.mxu0 0.0
      %333 = vmatpush1.msra.mxu0 0.0
      %334 = vmatprep.mubr.f32.mxu0 0.0
      %v335 = vand.u32 %v260, 4294901760
      %v336 = vsub.f32 %v260, %v335
      %v337 = vand.u32 %v336, 4294901760
      %v338 = vsub.f32 %v336, %v337
      %v339 = vand.u32 %v338, 4294901760
      %340 = vmatmul.mubr.f32.gmra.mrb[0].mxu0 %v339
      %v341 = vpop.f32.mrb[0].mxu0
      %v342 = vadd.f32 0.0, %v341
      %v343 = vpop.f32.mrb[0].mxu0
      %344 = vdwg.mxu0
      %345 = vmatprep.subr.mxu0 0.0
      %v346 = vand.u32 %v247, 4294901760
      %v347 = vsub.f32 %v247, %v346
      %v348 = vand.u32 %v347, 4294901760
      %v349 = vsub.f32 %v347, %v348
      %v350 = vand.u32 %v349, 4294901760
      %351 = vmatpush1.msra.mxu0 %v350
      %352 = vmatprep.subr.mxu0 0.0
      %v353 = vand.u32 %v248, 4294901760
      %v354 = vsub.f32 %v248, %v353
      %v355 = vand.u32 %v354, 4294901760
      %v356 = vsub.f32 %v354, %v355
      %v357 = vand.u32 %v356, 4294901760
      %358 = vmatpush1.msra.mxu0 %v357
      %359 = vmatprep.subr.mxu0 0.0
      %v360 = vand.u32 %v249, 4294901760
      %v361 = vsub.f32 %v249, %v360
      %v362 = vand.u32 %v361, 4294901760
      %v363 = vsub.f32 %v361, %v362
      %v364 = vand.u32 %v363, 4294901760
      %365 = vmatpush1.msra.mxu0 %v364
      %366 = vmatprep.subr.mxu0 0.0
      %v367 = vand.u32 %v250, 4294901760
      %v368 = vsub.f32 %v250, %v367
      %v369 = vand.u32 %v368, 4294901760
      %v370 = vsub.f32 %v368, %v369
      %v371 = vand.u32 %v370, 4294901760
      %372 = vmatpush1.msra.mxu0 %v371
      %373 = vmatprep.subr.mxu0 0.0
      %v374 = vand.u32 %v251, 4294901760
      %v375 = vsub.f32 %v251, %v374
      %v376 = vand.u32 %v375, 4294901760
      %v377 = vsub.f32 %v375, %v376
      %v378 = vand.u32 %v377, 4294901760
      %379 = vmatpush1.msra.mxu0 %v378
      %380 = vmatprep.subr.mxu0 0.0
      %v381 = vand.u32 %v252, 4294901760
      %v382 = vsub.f32 %v252, %v381
      %v383 = vand.u32 %v382, 4294901760
      %v384 = vsub.f32 %v382, %v383
      %v385 = vand.u32 %v384, 4294901760
      %386 = vmatpush1.msra.mxu0 %v385
      %387 = vmatprep.subr.mxu0 0.0
      %v388 = vand.u32 %v253, 4294901760
      %v389 = vsub.f32 %v253, %v388
      %v390 = vand.u32 %v389, 4294901760
      %v391 = vsub.f32 %v389, %v390
      %v392 = vand.u32 %v391, 4294901760
      %393 = vmatpush1.msra.mxu0 %v392
      %394 = vmatprep.subr.mxu0 0.0
      %v395 = vand.u32 %v254, 4294901760
      %v396 = vsub.f32 %v254, %v395
      %v397 = vand.u32 %v396, 4294901760
      %v398 = vsub.f32 %v396, %v397
      %v399 = vand.u32 %v398, 4294901760
      %400 = vmatpush1.msra.mxu0 %v399
      %401 = vmatprep.subr.mxu0 0.0
      %402 = vmatpush1.msra.mxu0 0.0
      %403 = vmatprep.subr.mxu0 0.0
      %404 = vmatpush1.msra.mxu0 0.0
      %405 = vmatprep.subr.mxu0 0.0
      %406 = vmatpush1.msra.mxu0 0.0
      %407 = vmatprep.subr.mxu0 0.0
      %408 = vmatpush1.msra.mxu0 0.0
      %409 = vmatprep.subr.mxu0 0.0
      %410 = vmatpush1.msra.mxu0 0.0
      %411 = vmatprep.subr.mxu0 0.0
      %412 = vmatpush1.msra.mxu0 0.0
      %413 = vmatprep.subr.mxu0 0.0
      %414 = vmatpush1.msra.mxu0 0.0
      %415 = vmatprep.subr.mxu0 0.0
      %416 = vmatpush1.msra.mxu0 0.0
      %417 = vmatprep.subr.mxu0 0.0
      %418 = vmatpush1.msra.mxu0 0.0
      %419 = vmatprep.subr.mxu0 0.0
      %420 = vmatpush1.msra.mxu0 0.0
      %421 = vmatprep.subr.mxu0 0.0
      %422 = vmatpush1.msra.mxu0 0.0
      %423 = vmatprep.subr.mxu0 0.0
      %424 = vmatpush1.msra.mxu0 0.0
      %425 = vmatprep.subr.mxu0 0.0
      %426 = vmatpush1.msra.mxu0 0.0
      %427 = vmatprep.subr.mxu0 0.0
      %428 = vmatpush1.msra.mxu0 0.0
      %429 = vmatprep.subr.mxu0 0.0
      %430 = vmatpush1.msra.mxu0 0.0
      %431 = vmatprep.subr.mxu0 0.0
      %432 = vmatpush1.msra.mxu0 0.0
      %433 = vmatprep.subr.mxu0 0.0
      %434 = vmatpush1.msra.mxu0 0.0
      %435 = vmatprep.subr.mxu0 0.0
      %436 = vmatpush1.msra.mxu0 0.0
      %437 = vmatprep.subr.mxu0 0.0
      %438 = vmatpush1.msra.mxu0 0.0
      %439 = vmatprep.subr.mxu0 0.0
      %440 = vmatpush1.msra.mxu0 0.0
      %441 = vmatprep.subr.mxu0 0.0
      %442 = vmatpush1.msra.mxu0 0.0
      %443 = vmatprep.subr.mxu0 0.0
      %444 = vmatpush1.msra.mxu0 0.0
      %445 = vmatprep.subr.mxu0 0.0
      %446 = vmatpush1.msra.mxu0 0.0
      %447 = vmatprep.subr.mxu0 0.0
      %448 = vmatpush1.msra.mxu0 0.0
      %449 = vmatprep.mubr.f32.mxu0 0.0
      %v450 = vand.u32 %v260, 4294901760
      %451 = vmatmul.mubr.f32.gmra.mrb[0].mxu0 %v450
      %v452 = vpop.f32.mrb[0].mxu0
      %v453 = vadd.f32 %v342, %v452
      %v454 = vpop.f32.mrb[0].mxu0
      %455 = vdwg.mxu0
      %456 = vmatprep.subr.mxu0 0.0
      %v457 = vand.u32 %v247, 4294901760
      %v458 = vsub.f32 %v247, %v457
      %459 = vmatpush1.msra.mxu0 %v458
      %460 = vmatprep.subr.mxu0 0.0
      %v461 = vand.u32 %v248, 4294901760
      %v462 = vsub.f32 %v248, %v461
      %463 = vmatpush1.msra.mxu0 %v462
      %464 = vmatprep.subr.mxu0 0.0
      %v465 = vand.u32 %v249, 4294901760
      %v466 = vsub.f32 %v249, %v465
      %467 = vmatpush1.msra.mxu0 %v466
      %468 = vmatprep.subr.mxu0 0.0
      %v469 = vand.u32 %v250, 4294901760
      %v470 = vsub.f32 %v250, %v469
      %471 = vmatpush1.msra.mxu0 %v470
      %472 = vmatprep.subr.mxu0 0.0
      %v473 = vand.u32 %v251, 4294901760
      %v474 = vsub.f32 %v251, %v473
      %475 = vmatpush1.msra.mxu0 %v474
      %476 = vmatprep.subr.mxu0 0.0
      %v477 = vand.u32 %v252, 4294901760
      %v478 = vsub.f32 %v252, %v477
      %479 = vmatpush1.msra.mxu0 %v478
      %480 = vmatprep.subr.mxu0 0.0
      %v481 = vand.u32 %v253, 4294901760
      %v482 = vsub.f32 %v253, %v481
      %483 = vmatpush1.msra.mxu0 %v482
      %484 = vmatprep.subr.mxu0 0.0
      %v485 = vand.u32 %v254, 4294901760
      %v486 = vsub.f32 %v254, %v485
      %487 = vmatpush1.msra.mxu0 %v486
      %488 = vmatprep.subr.mxu0 0.0
      %489 = vmatpush1.msra.mxu0 0.0
      %490 = vmatprep.subr.mxu0 0.0
      %491 = vmatpush1.msra.mxu0 0.0
      %492 = vmatprep.subr.mxu0 0.0
      %493 = vmatpush1.msra.mxu0 0.0
      %494 = vmatprep.subr.mxu0 0.0
      %495 = vmatpush1.msra.mxu0 0.0
      %496 = vmatprep.subr.mxu0 0.0
      %497 = vmatpush1.msra.mxu0 0.0
      %498 = vmatprep.subr.mxu0 0.0
      %499 = vmatpush1.msra.mxu0 0.0
      %500 = vmatprep.subr.mxu0 0.0
      %501 = vmatpush1.msra.mxu0 0.0
      %502 = vmatprep.subr.mxu0 0.0
      %503 = vmatpush1.msra.mxu0 0.0
      %504 = vmatprep.subr.mxu0 0.0
      %505 = vmatpush1.msra.mxu0 0.0
      %506 = vmatprep.subr.mxu0 0.0
      %507 = vmatpush1.msra.mxu0 0.0
      %508 = vmatprep.subr.mxu0 0.0
      %509 = vmatpush1.msra.mxu0 0.0
      %510 = vmatprep.subr.mxu0 0.0
      %511 = vmatpush1.msra.mxu0 0.0
      %512 = vmatprep.subr.mxu0 0.0
      %513 = vmatpush1.msra.mxu0 0.0
      %514 = vmatprep.subr.mxu0 0.0
      %515 = vmatpush1.msra.mxu0 0.0
      %516 = vmatprep.subr.mxu0 0.0
      %517 = vmatpush1.msra.mxu0 0.0
      %518 = vmatprep.subr.mxu0 0.0
      %519 = vmatpush1.msra.mxu0 0.0
      %520 = vmatprep.subr.mxu0 0.0
      %521 = vmatpush1.msra.mxu0 0.0
      %522 = vmatprep.subr.mxu0 0.0
      %523 = vmatpush1.msra.mxu0 0.0
      %524 = vmatprep.subr.mxu0 0.0
      %525 = vmatpush1.msra.mxu0 0.0
      %526 = vmatprep.subr.mxu0 0.0
      %527 = vmatpush1.msra.mxu0 0.0
      %528 = vmatprep.subr.mxu0 0.0
      %529 = vmatpush1.msra.mxu0 0.0
      %530 = vmatprep.subr.mxu0 0.0
      %531 = vmatpush1.msra.mxu0 0.0
      %532 = vmatprep.subr.mxu0 0.0
      %533 = vmatpush1.msra.mxu0 0.0
      %534 = vmatprep.subr.mxu0 0.0
      %535 = vmatpush1.msra.mxu0 0.0
      %536 = vmatprep.mubr.f32.mxu0 0.0
      %v537 = vand.u32 %v260, 4294901760
      %v538 = vsub.f32 %v260, %v537
      %539 = vmatmul.mubr.f32.gmra.mrb[0].mxu0 %v538
      %v540 = vpop.f32.mrb[0].mxu0
      %v541 = vadd.f32 %v453, %v540
      %v542 = vpop.f32.mrb[0].mxu0
      %543 = vdwg.mxu0
      %544 = vmatprep.subr.mxu0 0.0
      %v545 = vand.u32 %v247, 4294901760
      %546 = vmatpush1.msra.mxu0 %v545
      %547 = vmatprep.subr.mxu0 0.0
      %v548 = vand.u32 %v248, 4294901760
      %549 = vmatpush1.msra.mxu0 %v548
      %550 = vmatprep.subr.mxu0 0.0
      %v551 = vand.u32 %v249, 4294901760
      %552 = vmatpush1.msra.mxu0 %v551
      %553 = vmatprep.subr.mxu0 0.0
      %v554 = vand.u32 %v250, 4294901760
      %555 = vmatpush1.msra.mxu0 %v554
      %556 = vmatprep.subr.mxu0 0.0
      %v557 = vand.u32 %v251, 4294901760
      %558 = vmatpush1.msra.mxu0 %v557
      %559 = vmatprep.subr.mxu0 0.0
      %v560 = vand.u32 %v252, 4294901760
      %561 = vmatpush1.msra.mxu0 %v560
      %562 = vmatprep.subr.mxu0 0.0
      %v563 = vand.u32 %v253, 4294901760
      %564 = vmatpush1.msra.mxu0 %v563
      %565 = vmatprep.subr.mxu0 0.0
      %v566 = vand.u32 %v254, 4294901760
      %567 = vmatpush1.msra.mxu0 %v566
      %568 = vmatprep.subr.mxu0 0.0
      %569 = vmatpush1.msra.mxu0 0.0
      %570 = vmatprep.subr.mxu0 0.0
      %571 = vmatpush1.msra.mxu0 0.0
      %572 = vmatprep.subr.mxu0 0.0
      %573 = vmatpush1.msra.mxu0 0.0
      %574 = vmatprep.subr.mxu0 0.0
      %575 = vmatpush1.msra.mxu0 0.0
      %576 = vmatprep.subr.mxu0 0.0
      %577 = vmatpush1.msra.mxu0 0.0
      %578 = vmatprep.subr.mxu0 0.0
      %579 = vmatpush1.msra.mxu0 0.0
      %580 = vmatprep.subr.mxu0 0.0
      %581 = vmatpush1.msra.mxu0 0.0
      %582 = vmatprep.subr.mxu0 0.0
      %583 = vmatpush1.msra.mxu0 0.0
      %584 = vmatprep.subr.mxu0 0.0
      %585 = vmatpush1.msra.mxu0 0.0
      %586 = vmatprep.subr.mxu0 0.0
      %587 = vmatpush1.msra.mxu0 0.0
      %588 = vmatprep.subr.mxu0 0.0
      %589 = vmatpush1.msra.mxu0 0.0
      %590 = vmatprep.subr.mxu0 0.0
      %591 = vmatpush1.msra.mxu0 0.0
      %592 = vmatprep.subr.mxu0 0.0
      %593 = vmatpush1.msra.mxu0 0.0
      %594 = vmatprep.subr.mxu0 0.0
      %595 = vmatpush1.msra.mxu0 0.0
      %596 = vmatprep.subr.mxu0 0.0
      %597 = vmatpush1.msra.mxu0 0.0
      %598 = vmatprep.subr.mxu0 0.0
      %599 = vmatpush1.msra.mxu0 0.0
      %600 = vmatprep.subr.mxu0 0.0
      %601 = vmatpush1.msra.mxu0 0.0
      %602 = vmatprep.subr.mxu0 0.0
      %603 = vmatpush1.msra.mxu0 0.0
      %604 = vmatprep.subr.mxu0 0.0
      %605 = vmatpush1.msra.mxu0 0.0
      %606 = vmatprep.subr.mxu0 0.0
      %607 = vmatpush1.msra.mxu0 0.0
      %608 = vmatprep.subr.mxu0 0.0
      %609 = vmatpush1.msra.mxu0 0.0
      %610 = vmatprep.subr.mxu0 0.0
      %611 = vmatpush1.msra.mxu0 0.0
      %612 = vmatprep.subr.mxu0 0.0
      %613 = vmatpush1.msra.mxu0 0.0
      %614 = vmatprep.subr.mxu0 0.0
      %615 = vmatpush1.msra.mxu0 0.0
      %616 = vmatprep.mubr.f32.mxu0 0.0
      %v617 = vand.u32 %v260, 4294901760
      %v618 = vsub.f32 %v260, %v617
      %v619 = vand.u32 %v618, 4294901760
      %620 = vmatmul.mubr.f32.gmra.mrb[0].mxu0 %v619
      %v621 = vpop.f32.mrb[0].mxu0
      %v622 = vadd.f32 %v541, %v621
      %v623 = vpop.f32.mrb[0].mxu0
      %624 = vdwg.mxu0
      %625 = vmatprep.subr.mxu0 0.0
      %v626 = vand.u32 %v247, 4294901760
      %v627 = vsub.f32 %v247, %v626
      %v628 = vand.u32 %v627, 4294901760
      %629 = vmatpush1.msra.mxu0 %v628
      %630 = vmatprep.subr.mxu0 0.0
      %v631 = vand.u32 %v248, 4294901760
      %v632 = vsub.f32 %v248, %v631
      %v633 = vand.u32 %v632, 4294901760
      %634 = vmatpush1.msra.mxu0 %v633
      %635 = vmatprep.subr.mxu0 0.0
      %v636 = vand.u32 %v249, 4294901760
      %v637 = vsub.f32 %v249, %v636
      %v638 = vand.u32 %v637, 4294901760
      %639 = vmatpush1.msra.mxu0 %v638
      %640 = vmatprep.subr.mxu0 0.0
      %v641 = vand.u32 %v250, 4294901760
      %v642 = vsub.f32 %v250, %v641
      %v643 = vand.u32 %v642, 4294901760
      %644 = vmatpush1.msra.mxu0 %v643
      %645 = vmatprep.subr.mxu0 0.0
      %v646 = vand.u32 %v251, 4294901760
      %v647 = vsub.f32 %v251, %v646
      %v648 = vand.u32 %v647, 4294901760
      %649 = vmatpush1.msra.mxu0 %v648
      %650 = vmatprep.subr.mxu0 0.0
      %v651 = vand.u32 %v252, 4294901760
      %v652 = vsub.f32 %v252, %v651
      %v653 = vand.u32 %v652, 4294901760
      %654 = vmatpush1.msra.mxu0 %v653
      %655 = vmatprep.subr.mxu0 0.0
      %v656 = vand.u32 %v253, 4294901760
      %v657 = vsub.f32 %v253, %v656
      %v658 = vand.u32 %v657, 4294901760
      %659 = vmatpush1.msra.mxu0 %v658
      %660 = vmatprep.subr.mxu0 0.0
      %v661 = vand.u32 %v254, 4294901760
      %v662 = vsub.f32 %v254, %v661
      %v663 = vand.u32 %v662, 4294901760
      %664 = vmatpush1.msra.mxu0 %v663
      %665 = vmatprep.subr.mxu0 0.0
      %666 = vmatpush1.msra.mxu0 0.0
      %667 = vmatprep.subr.mxu0 0.0
      %668 = vmatpush1.msra.mxu0 0.0
      %669 = vmatprep.subr.mxu0 0.0
      %670 = vmatpush1.msra.mxu0 0.0
      %671 = vmatprep.subr.mxu0 0.0
      %672 = vmatpush1.msra.mxu0 0.0
      %673 = vmatprep.subr.mxu0 0.0
      %674 = vmatpush1.msra.mxu0 0.0
      %675 = vmatprep.subr.mxu0 0.0
      %676 = vmatpush1.msra.mxu0 0.0
      %677 = vmatprep.subr.mxu0 0.0
      %678 = vmatpush1.msra.mxu0 0.0
      %679 = vmatprep.subr.mxu0 0.0
      %680 = vmatpush1.msra.mxu0 0.0
      %681 = vmatprep.subr.mxu0 0.0
      %682 = vmatpush1.msra.mxu0 0.0
      %683 = vmatprep.subr.mxu0 0.0
      %684 = vmatpush1.msra.mxu0 0.0
      %685 = vmatprep.subr.mxu0 0.0
      %686 = vmatpush1.msra.mxu0 0.0
      %687 = vmatprep.subr.mxu0 0.0
      %688 = vmatpush1.msra.mxu0 0.0
      %689 = vmatprep.subr.mxu0 0.0
      %690 = vmatpush1.msra.mxu0 0.0
      %691 = vmatprep.subr.mxu0 0.0
      %692 = vmatpush1.msra.mxu0 0.0
      %693 = vmatprep.subr.mxu0 0.0
      %694 = vmatpush1.msra.mxu0 0.0
      %695 = vmatprep.subr.mxu0 0.0
      %696 = vmatpush1.msra.mxu0 0.0
      %697 = vmatprep.subr.mxu0 0.0
      %698 = vmatpush1.msra.mxu0 0.0
      %699 = vmatprep.subr.mxu0 0.0
      %700 = vmatpush1.msra.mxu0 0.0
      %701 = vmatprep.subr.mxu0 0.0
      %702 = vmatpush1.msra.mxu0 0.0
      %703 = vmatprep.subr.mxu0 0.0
      %704 = vmatpush1.msra.mxu0 0.0
      %705 = vmatprep.subr.mxu0 0.0
      %706 = vmatpush1.msra.mxu0 0.0
      %707 = vmatprep.subr.mxu0 0.0
      %708 = vmatpush1.msra.mxu0 0.0
      %709 = vmatprep.subr.mxu0 0.0
      %710 = vmatpush1.msra.mxu0 0.0
      %711 = vmatprep.subr.mxu0 0.0
      %712 = vmatpush1.msra.mxu0 0.0
      %713 = vmatprep.mubr.f32.mxu0 0.0
      %v714 = vand.u32 %v260, 4294901760
      %715 = vmatmul.mubr.f32.gmra.mrb[0].mxu0 %v714
      %v716 = vpop.f32.mrb[0].mxu0
      %v717 = vadd.f32 %v622, %v716
      %v718 = vpop.f32.mrb[0].mxu0
      %719 = vdwg.mxu0
      %720 = vmatprep.subr.mxu0 0.0
      %v721 = vand.u32 %v247, 4294901760
      %722 = vmatpush1.msra.mxu0 %v721
      %723 = vmatprep.subr.mxu0 0.0
      %v724 = vand.u32 %v248, 4294901760
      %725 = vmatpush1.msra.mxu0 %v724
      %726 = vmatprep.subr.mxu0 0.0
      %v727 = vand.u32 %v249, 4294901760
      %728 = vmatpush1.msra.mxu0 %v727
      %729 = vmatprep.subr.mxu0 0.0
      %v730 = vand.u32 %v250, 4294901760
      %731 = vmatpush1.msra.mxu0 %v730
      %732 = vmatprep.subr.mxu0 0.0
      %v733 = vand.u32 %v251, 4294901760
      %734 = vmatpush1.msra.mxu0 %v733
      %735 = vmatprep.subr.mxu0 0.0
      %v736 = vand.u32 %v252, 4294901760
      %737 = vmatpush1.msra.mxu0 %v736
      %738 = vmatprep.subr.mxu0 0.0
      %v739 = vand.u32 %v253, 4294901760
      %740 = vmatpush1.msra.mxu0 %v739
      %741 = vmatprep.subr.mxu0 0.0
      %v742 = vand.u32 %v254, 4294901760
      %743 = vmatpush1.msra.mxu0 %v742
      %744 = vmatprep.subr.mxu0 0.0
      %745 = vmatpush1.msra.mxu0 0.0
      %746 = vmatprep.subr.mxu0 0.0
      %747 = vmatpush1.msra.mxu0 0.0
      %748 = vmatprep.subr.mxu0 0.0
      %749 = vmatpush1.msra.mxu0 0.0
      %750 = vmatprep.subr.mxu0 0.0
      %751 = vmatpush1.msra.mxu0 0.0
      %752 = vmatprep.subr.mxu0 0.0
      %753 = vmatpush1.msra.mxu0 0.0
      %754 = vmatprep.subr.mxu0 0.0
      %755 = vmatpush1.msra.mxu0 0.0
      %756 = vmatprep.subr.mxu0 0.0
      %757 = vmatpush1.msra.mxu0 0.0
      %758 = vmatprep.subr.mxu0 0.0
      %759 = vmatpush1.msra.mxu0 0.0
      %760 = vmatprep.subr.mxu0 0.0
      %761 = vmatpush1.msra.mxu0 0.0
      %762 = vmatprep.subr.mxu0 0.0
      %763 = vmatpush1.msra.mxu0 0.0
      %764 = vmatprep.subr.mxu0 0.0
      %765 = vmatpush1.msra.mxu0 0.0
      %766 = vmatprep.subr.mxu0 0.0
      %767 = vmatpush1.msra.mxu0 0.0
      %768 = vmatprep.subr.mxu0 0.0
      %769 = vmatpush1.msra.mxu0 0.0
      %770 = vmatprep.subr.mxu0 0.0
      %771 = vmatpush1.msra.mxu0 0.0
      %772 = vmatprep.subr.mxu0 0.0
      %773 = vmatpush1.msra.mxu0 0.0
      %774 = vmatprep.subr.mxu0 0.0
      %775 = vmatpush1.msra.mxu0 0.0
      %776 = vmatprep.subr.mxu0 0.0
      %777 = vmatpush1.msra.mxu0 0.0
      %778 = vmatprep.subr.mxu0 0.0
      %779 = vmatpush1.msra.mxu0 0.0
      %780 = vmatprep.subr.mxu0 0.0
      %781 = vmatpush1.msra.mxu0 0.0
      %782 = vmatprep.subr.mxu0 0.0
      %783 = vmatpush1.msra.mxu0 0.0
      %784 = vmatprep.subr.mxu0 0.0
      %785 = vmatpush1.msra.mxu0 0.0
      %786 = vmatprep.subr.mxu0 0.0
      %787 = vmatpush1.msra.mxu0 0.0
      %788 = vmatprep.subr.mxu0 0.0
      %789 = vmatpush1.msra.mxu0 0.0
      %790 = vmatprep.subr.mxu0 0.0
      %791 = vmatpush1.msra.mxu0 0.0
      %792 = vmatprep.mubr.f32.mxu0 0.0
      %v793 = vand.u32 %v260, 4294901760
      %794 = vmatmul.mubr.f32.gmra.mrb[0].mxu0 %v793
      %v795 = vpop.f32.mrb[0].mxu0
      %v796 = vadd.f32 %v717, %v795
      %v797 = vpop.f32.mrb[0].mxu0
      %798 = vdwg.mxu0
      %v799 = vadd.f32 %v256, %v796
      %800 = vst [vmem:[#allocation2] sm:$0xff] %v799
      %v801 = vld [vmem:[#allocation3] sm:$0xff]
      %v802 = vmul.f32 %v246, %v246
      %v804 = vsel %vm258, %v802, 0
      %806 = vmatprep.subr.mxu0 0.0
      %v807 = vand.u32 %v247, 4294901760
      %808 = vmatpush1.msra.mxu0 %v807
      %809 = vmatprep.subr.mxu0 0.0
      %v810 = vand.u32 %v248, 4294901760
      %811 = vmatpush1.msra.mxu0 %v810
      %812 = vmatprep.subr.mxu0 0.0
      %v813 = vand.u32 %v249, 4294901760
      %814 = vmatpush1.msra.mxu0 %v813
      %815 = vmatprep.subr.mxu0 0.0
      %v816 = vand.u32 %v250, 4294901760
      %817 = vmatpush1.msra.mxu0 %v816
      %818 = vmatprep.subr.mxu0 0.0
      %v819 = vand.u32 %v251, 4294901760
      %820 = vmatpush1.msra.mxu0 %v819
      %821 = vmatprep.subr.mxu0 0.0
      %v822 = vand.u32 %v252, 4294901760
      %823 = vmatpush1.msra.mxu0 %v822
      %824 = vmatprep.subr.mxu0 0.0
      %v825 = vand.u32 %v253, 4294901760
      %826 = vmatpush1.msra.mxu0 %v825
      %827 = vmatprep.subr.mxu0 0.0
      %v828 = vand.u32 %v254, 4294901760
      %829 = vmatpush1.msra.mxu0 %v828
      %830 = vmatprep.subr.mxu0 0.0
      %831 = vmatpush1.msra.mxu0 0.0
      %832 = vmatprep.subr.mxu0 0.0
      %833 = vmatpush1.msra.mxu0 0.0
      %834 = vmatprep.subr.mxu0 0.0
      %835 = vmatpush1.msra.mxu0 0.0
      %836 = vmatprep.subr.mxu0 0.0
      %837 = vmatpush1.msra.mxu0 0.0
      %838 = vmatprep.subr.mxu0 0.0
      %839 = vmatpush1.msra.mxu0 0.0
      %840 = vmatprep.subr.mxu0 0.0
      %841 = vmatpush1.msra.mxu0 0.0
      %842 = vmatprep.subr.mxu0 0.0
      %843 = vmatpush1.msra.mxu0 0.0
      %844 = vmatprep.subr.mxu0 0.0
      %845 = vmatpush1.msra.mxu0 0.0
      %846 = vmatprep.subr.mxu0 0.0
      %847 = vmatpush1.msra.mxu0 0.0
      %848 = vmatprep.subr.mxu0 0.0
      %849 = vmatpush1.msra.mxu0 0.0
      %850 = vmatprep.subr.mxu0 0.0
      %851 = vmatpush1.msra.mxu0 0.0
      %852 = vmatprep.subr.mxu0 0.0
      %853 = vmatpush1.msra.mxu0 0.0
      %854 = vmatprep.subr.mxu0 0.0
      %855 = vmatpush1.msra.mxu0 0.0
      %856 = vmatprep.subr.mxu0 0.0
      %857 = vmatpush1.msra.mxu0 0.0
      %858 = vmatprep.subr.mxu0 0.0
      %859 = vmatpush1.msra.mxu0 0.0
      %860 = vmatprep.subr.mxu0 0.0
      %861 = vmatpush1.msra.mxu0 0.0
      %862 = vmatprep.subr.mxu0 0.0
      %863 = vmatpush1.msra.mxu0 0.0
      %864 = vmatprep.subr.mxu0 0.0
      %865 = vmatpush1.msra.mxu0 0.0
      %866 = vmatprep.subr.mxu0 0.0
      %867 = vmatpush1.msra.mxu0 0.0
      %868 = vmatprep.subr.mxu0 0.0
      %869 = vmatpush1.msra.mxu0 0.0
      %870 = vmatprep.subr.mxu0 0.0
      %871 = vmatpush1.msra.mxu0 0.0
      %872 = vmatprep.subr.mxu0 0.0
      %873 = vmatpush1.msra.mxu0 0.0
      %874 = vmatprep.subr.mxu0 0.0
      %875 = vmatpush1.msra.mxu0 0.0
      %876 = vmatprep.subr.mxu0 0.0
      %877 = vmatpush1.msra.mxu0 0.0
      %878 = vmatprep.mubr.f32.mxu0 0.0
      %v879 = vand.u32 %v804, 4294901760
      %v880 = vsub.f32 %v804, %v879
      %v881 = vand.u32 %v880, 4294901760
      %v882 = vsub.f32 %v880, %v881
      %v883 = vand.u32 %v882, 4294901760
      %884 = vmatmul.mubr.f32.gmra.mrb[0].mxu0 %v883
      %v885 = vpop.f32.mrb[0].mxu0
      %v886 = vadd.f32 0.0, %v885
      %v887 = vpop.f32.mrb[0].mxu0
      %888 = vdwg.mxu0
      %889 = vmatprep.subr.mxu0 0.0
      %v890 = vand.u32 %v247, 4294901760
      %v891 = vsub.f32 %v247, %v890
      %v892 = vand.u32 %v891, 4294901760
      %v893 = vsub.f32 %v891, %v892
      %v894 = vand.u32 %v893, 4294901760
      %895 = vmatpush1.msra.mxu0 %v894
      %896 = vmatprep.subr.mxu0 0.0
      %v897 = vand.u32 %v248, 4294901760
      %v898 = vsub.f32 %v248, %v897
      %v899 = vand.u32 %v898, 4294901760
      %v900 = vsub.f32 %v898, %v899
      %v901 = vand.u32 %v900, 4294901760
      %902 = vmatpush1.msra.mxu0 %v901
      %903 = vmatprep.subr.mxu0 0.0
      %v904 = vand.u32 %v249, 4294901760
      %v905 = vsub.f32 %v249, %v904
      %v906 = vand.u32 %v905, 4294901760
      %v907 = vsub.f32 %v905, %v906
      %v908 = vand.u32 %v907, 4294901760
      %909 = vmatpush1.msra.mxu0 %v908
      %910 = vmatprep.subr.mxu0 0.0
      %v911 = vand.u32 %v250, 4294901760
      %v912 = vsub.f32 %v250, %v911
      %v913 = vand.u32 %v912, 4294901760
      %v914 = vsub.f32 %v912, %v913
      %v915 = vand.u32 %v914, 4294901760
      %916 = vmatpush1.msra.mxu0 %v915
      %917 = vmatprep.subr.mxu0 0.0
      %v918 = vand.u32 %v251, 4294901760
      %v919 = vsub.f32 %v251, %v918
      %v920 = vand.u32 %v919, 4294901760
      %v921 = vsub.f32 %v919, %v920
      %v922 = vand.u32 %v921, 4294901760
      %923 = vmatpush1.msra.mxu0 %v922
      %924 = vmatprep.subr.mxu0 0.0
      %v925 = vand.u32 %v252, 4294901760
      %v926 = vsub.f32 %v252, %v925
      %v927 = vand.u32 %v926, 4294901760
      %v928 = vsub.f32 %v926, %v927
      %v929 = vand.u32 %v928, 4294901760
      %930 = vmatpush1.msra.mxu0 %v929
      %931 = vmatprep.subr.mxu0 0.0
      %v932 = vand.u32 %v253, 4294901760
      %v933 = vsub.f32 %v253, %v932
      %v934 = vand.u32 %v933, 4294901760
      %v935 = vsub.f32 %v933, %v934
      %v936 = vand.u32 %v935, 4294901760
      %937 = vmatpush1.msra.mxu0 %v936
      %938 = vmatprep.subr.mxu0 0.0
      %v939 = vand.u32 %v254, 4294901760
      %v940 = vsub.f32 %v254, %v939
      %v941 = vand.u32 %v940, 4294901760
      %v942 = vsub.f32 %v940, %v941
      %v943 = vand.u32 %v942, 4294901760
      %944 = vmatpush1.msra.mxu0 %v943
      %945 = vmatprep.subr.mxu0 0.0
      %946 = vmatpush1.msra.mxu0 0.0
      %947 = vmatprep.subr.mxu0 0.0
      %948 = vmatpush1.msra.mxu0 0.0
      %949 = vmatprep.subr.mxu0 0.0
      %950 = vmatpush1.msra.mxu0 0.0
      %951 = vmatprep.subr.mxu0 0.0
      %952 = vmatpush1.msra.mxu0 0.0
      %953 = vmatprep.subr.mxu0 0.0
      %954 = vmatpush1.msra.mxu0 0.0
      %955 = vmatprep.subr.mxu0 0.0
      %956 = vmatpush1.msra.mxu0 0.0
      %957 = vmatprep.subr.mxu0 0.0
      %958 = vmatpush1.msra.mxu0 0.0
      %959 = vmatprep.subr.mxu0 0.0
      %960 = vmatpush1.msra.mxu0 0.0
      %961 = vmatprep.subr.mxu0 0.0
      %962 = vmatpush1.msra.mxu0 0.0
      %963 = vmatprep.subr.mxu0 0.0
      %964 = vmatpush1.msra.mxu0 0.0
      %965 = vmatprep.subr.mxu0 0.0
      %966 = vmatpush1.msra.mxu0 0.0
      %967 = vmatprep.subr.mxu0 0.0
      %968 = vmatpush1.msra.mxu0 0.0
      %969 = vmatprep.subr.mxu0 0.0
      %970 = vmatpush1.msra.mxu0 0.0
      %971 = vmatprep.subr.mxu0 0.0
      %972 = vmatpush1.msra.mxu0 0.0
      %973 = vmatprep.subr.mxu0 0.0
      %974 = vmatpush1.msra.mxu0 0.0
      %975 = vmatprep.subr.mxu0 0.0
      %976 = vmatpush1.msra.mxu0 0.0
      %977 = vmatprep.subr.mxu0 0.0
      %978 = vmatpush1.msra.mxu0 0.0
      %979 = vmatprep.subr.mxu0 0.0
      %980 = vmatpush1.msra.mxu0 0.0
      %981 = vmatprep.subr.mxu0 0.0
      %982 = vmatpush1.msra.mxu0 0.0
      %983 = vmatprep.subr.mxu0 0.0
      %984 = vmatpush1.msra.mxu0 0.0
      %985 = vmatprep.subr.mxu0 0.0
      %986 = vmatpush1.msra.mxu0 0.0
      %987 = vmatprep.subr.mxu0 0.0
      %988 = vmatpush1.msra.mxu0 0.0
      %989 = vmatprep.subr.mxu0 0.0
      %990 = vmatpush1.msra.mxu0 0.0
      %991 = vmatprep.subr.mxu0 0.0
      %992 = vmatpush1.msra.mxu0 0.0
      %993 = vmatprep.mubr.f32.mxu0 0.0
      %v994 = vand.u32 %v804, 4294901760
      %995 = vmatmul.mubr.f32.gmra.mrb[0].mxu0 %v994
      %v996 = vpop.f32.mrb[0].mxu0
      %v997 = vadd.f32 %v886, %v996
      %v998 = vpop.f32.mrb[0].mxu0
      %999 = vdwg.mxu0
      %1000 = vmatprep.subr.mxu0 0.0
      %v1001 = vand.u32 %v247, 4294901760
      %v1002 = vsub.f32 %v247, %v1001
      %1003 = vmatpush1.msra.mxu0 %v1002
      %1004 = vmatprep.subr.mxu0 0.0
      %v1005 = vand.u32 %v248, 4294901760
      %v1006 = vsub.f32 %v248, %v1005
      %1007 = vmatpush1.msra.mxu0 %v1006
      %1008 = vmatprep.subr.mxu0 0.0
      %v1009 = vand.u32 %v249, 4294901760
      %v1010 = vsub.f32 %v249, %v1009
      %1011 = vmatpush1.msra.mxu0 %v1010
      %1012 = vmatprep.subr.mxu0 0.0
      %v1013 = vand.u32 %v250, 4294901760
      %v1014 = vsub.f32 %v250, %v1013
      %1015 = vmatpush1.msra.mxu0 %v1014
      %1016 = vmatprep.subr.mxu0 0.0
      %v1017 = vand.u32 %v251, 4294901760
      %v1018 = vsub.f32 %v251, %v1017
      %1019 = vmatpush1.msra.mxu0 %v1018
      %1020 = vmatprep.subr.mxu0 0.0
      %v1021 = vand.u32 %v252, 4294901760
      %v1022 = vsub.f32 %v252, %v1021
      %1023 = vmatpush1.msra.mxu0 %v1022
      %1024 = vmatprep.subr.mxu0 0.0
      %v1025 = vand.u32 %v253, 4294901760
      %v1026 = vsub.f32 %v253, %v1025
      %1027 = vmatpush1.msra.mxu0 %v1026
      %1028 = vmatprep.subr.mxu0 0.0
      %v1029 = vand.u32 %v254, 4294901760
      %v1030 = vsub.f32 %v254, %v1029
      %1031 = vmatpush1.msra.mxu0 %v1030
      %1032 = vmatprep.subr.mxu0 0.0
      %1033 = vmatpush1.msra.mxu0 0.0
      %1034 = vmatprep.subr.mxu0 0.0
      %1035 = vmatpush1.msra.mxu0 0.0
      %1036 = vmatprep.subr.mxu0 0.0
      %1037 = vmatpush1.msra.mxu0 0.0
      %1038 = vmatprep.subr.mxu0 0.0
      %1039 = vmatpush1.msra.mxu0 0.0
      %1040 = vmatprep.subr.mxu0 0.0
      %1041 = vmatpush1.msra.mxu0 0.0
      %1042 = vmatprep.subr.mxu0 0.0
      %1043 = vmatpush1.msra.mxu0 0.0
      %1044 = vmatprep.subr.mxu0 0.0
      %1045 = vmatpush1.msra.mxu0 0.0
      %1046 = vmatprep.subr.mxu0 0.0
      %1047 = vmatpush1.msra.mxu0 0.0
      %1048 = vmatprep.subr.mxu0 0.0
      %1049 = vmatpush1.msra.mxu0 0.0
      %1050 = vmatprep.subr.mxu0 0.0
      %1051 = vmatpush1.msra.mxu0 0.0
      %1052 = vmatprep.subr.mxu0 0.0
      %1053 = vmatpush1.msra.mxu0 0.0
      %1054 = vmatprep.subr.mxu0 0.0
      %1055 = vmatpush1.msra.mxu0 0.0
      %1056 = vmatprep.subr.mxu0 0.0
      %1057 = vmatpush1.msra.mxu0 0.0
      %1058 = vmatprep.subr.mxu0 0.0
      %1059 = vmatpush1.msra.mxu0 0.0
      %1060 = vmatprep.subr.mxu0 0.0
      %1061 = vmatpush1.msra.mxu0 0.0
      %1062 = vmatprep.subr.mxu0 0.0
      %1063 = vmatpush1.msra.mxu0 0.0
      %1064 = vmatprep.subr.mxu0 0.0
      %1065 = vmatpush1.msra.mxu0 0.0
      %1066 = vmatprep.subr.mxu0 0.0
      %1067 = vmatpush1.msra.mxu0 0.0
      %1068 = vmatprep.subr.mxu0 0.0
      %1069 = vmatpush1.msra.mxu0 0.0
      %1070 = vmatprep.subr.mxu0 0.0
      %1071 = vmatpush1.msra.mxu0 0.0
      %1072 = vmatprep.subr.mxu0 0.0
      %1073 = vmatpush1.msra.mxu0 0.0
      %1074 = vmatprep.subr.mxu0 0.0
      %1075 = vmatpush1.msra.mxu0 0.0
      %1076 = vmatprep.subr.mxu0 0.0
      %1077 = vmatpush1.msra.mxu0 0.0
      %1078 = vmatprep.subr.mxu0 0.0
      %1079 = vmatpush1.msra.mxu0 0.0
      %1080 = vmatprep.mubr.f32.mxu0 0.0
      %v1081 = vand.u32 %v804, 4294901760
      %v1082 = vsub.f32 %v804, %v1081
      %1083 = vmatmul.mubr.f32.gmra.mrb[0].mxu0 %v1082
      %v1084 = vpop.f32.mrb[0].mxu0
      %v1085 = vadd.f32 %v997, %v1084
      %v1086 = vpop.f32.mrb[0].mxu0
      %1087 = vdwg.mxu0
      %1088 = vmatprep.subr.mxu0 0.0
      %v1089 = vand.u32 %v247, 4294901760
      %1090 = vmatpush1.msra.mxu0 %v1089
      %1091 = vmatprep.subr.mxu0 0.0
      %v1092 = vand.u32 %v248, 4294901760
      %1093 = vmatpush1.msra.mxu0 %v1092
      %1094 = vmatprep.subr.mxu0 0.0
      %v1095 = vand.u32 %v249, 4294901760
      %1096 = vmatpush1.msra.mxu0 %v1095
      %1097 = vmatprep.subr.mxu0 0.0
      %v1098 = vand.u32 %v250, 4294901760
      %1099 = vmatpush1.msra.mxu0 %v1098
      %1100 = vmatprep.subr.mxu0 0.0
      %v1101 = vand.u32 %v251, 4294901760
      %1102 = vmatpush1.msra.mxu0 %v1101
      %1103 = vmatprep.subr.mxu0 0.0
      %v1104 = vand.u32 %v252, 4294901760
      %1105 = vmatpush1.msra.mxu0 %v1104
      %1106 = vmatprep.subr.mxu0 0.0
      %v1107 = vand.u32 %v253, 4294901760
      %1108 = vmatpush1.msra.mxu0 %v1107
      %1109 = vmatprep.subr.mxu0 0.0
      %v1110 = vand.u32 %v254, 4294901760
      %1111 = vmatpush1.msra.mxu0 %v1110
      %1112 = vmatprep.subr.mxu0 0.0
      %1113 = vmatpush1.msra.mxu0 0.0
      %1114 = vmatprep.subr.mxu0 0.0
      %1115 = vmatpush1.msra.mxu0 0.0
      %1116 = vmatprep.subr.mxu0 0.0
      %1117 = vmatpush1.msra.mxu0 0.0
      %1118 = vmatprep.subr.mxu0 0.0
      %1119 = vmatpush1.msra.mxu0 0.0
      %1120 = vmatprep.subr.mxu0 0.0
      %1121 = vmatpush1.msra.mxu0 0.0
      %1122 = vmatprep.subr.mxu0 0.0
      %1123 = vmatpush1.msra.mxu0 0.0
      %1124 = vmatprep.subr.mxu0 0.0
      %1125 = vmatpush1.msra.mxu0 0.0
      %1126 = vmatprep.subr.mxu0 0.0
      %1127 = vmatpush1.msra.mxu0 0.0
      %1128 = vmatprep.subr.mxu0 0.0
      %1129 = vmatpush1.msra.mxu0 0.0
      %1130 = vmatprep.subr.mxu0 0.0
      %1131 = vmatpush1.msra.mxu0 0.0
      %1132 = vmatprep.subr.mxu0 0.0
      %1133 = vmatpush1.msra.mxu0 0.0
      %1134 = vmatprep.subr.mxu0 0.0
      %1135 = vmatpush1.msra.mxu0 0.0
      %1136 = vmatprep.subr.mxu0 0.0
      %1137 = vmatpush1.msra.mxu0 0.0
      %1138 = vmatprep.subr.mxu0 0.0
      %1139 = vmatpush1.msra.mxu0 0.0
      %1140 = vmatprep.subr.mxu0 0.0
      %1141 = vmatpush1.msra.mxu0 0.0
      %1142 = vmatprep.subr.mxu0 0.0
      %1143 = vmatpush1.msra.mxu0 0.0
      %1144 = vmatprep.subr.mxu0 0.0
      %1145 = vmatpush1.msra.mxu0 0.0
      %1146 = vmatprep.subr.mxu0 0.0
      %1147 = vmatpush1.msra.mxu0 0.0
      %1148 = vmatprep.subr.mxu0 0.0
      %1149 = vmatpush1.msra.mxu0 0.0
      %1150 = vmatprep.subr.mxu0 0.0
      %1151 = vmatpush1.msra.mxu0 0.0
      %1152 = vmatprep.subr.mxu0 0.0
      %1153 = vmatpush1.msra.mxu0 0.0
      %1154 = vmatprep.subr.mxu0 0.0
      %1155 = vmatpush1.msra.mxu0 0.0
      %1156 = vmatprep.subr.mxu0 0.0
      %1157 = vmatpush1.msra.mxu0 0.0
      %1158 = vmatprep.subr.mxu0 0.0
      %1159 = vmatpush1.msra.mxu0 0.0
      %1160 = vmatprep.mubr.f32.mxu0 0.0
      %v1161 = vand.u32 %v804, 4294901760
      %v1162 = vsub.f32 %v804, %v1161
      %v1163 = vand.u32 %v1162, 4294901760
      %1164 = vmatmul.mubr.f32.gmra.mrb[0].mxu0 %v1163
      %v1165 = vpop.f32.mrb[0].mxu0
      %v1166 = vadd.f32 %v1085, %v1165
      %v1167 = vpop.f32.mrb[0].mxu0
      %1168 = vdwg.mxu0
      %1169 = vmatprep.subr.mxu0 0.0
      %v1170 = vand.u32 %v247, 4294901760
      %v1171 = vsub.f32 %v247, %v1170
      %v1172 = vand.u32 %v1171, 4294901760
      %1173 = vmatpush1.msra.mxu0 %v1172
      %1174 = vmatprep.subr.mxu0 0.0
      %v1175 = vand.u32 %v248, 4294901760
      %v1176 = vsub.f32 %v248, %v1175
      %v1177 = vand.u32 %v1176, 4294901760
      %1178 = vmatpush1.msra.mxu0 %v1177
      %1179 = vmatprep.subr.mxu0 0.0
      %v1180 = vand.u32 %v249, 4294901760
      %v1181 = vsub.f32 %v249, %v1180
      %v1182 = vand.u32 %v1181, 4294901760
      %1183 = vmatpush1.msra.mxu0 %v1182
      %1184 = vmatprep.subr.mxu0 0.0
      %v1185 = vand.u32 %v250, 4294901760
      %v1186 = vsub.f32 %v250, %v1185
      %v1187 = vand.u32 %v1186, 4294901760
      %1188 = vmatpush1.msra.mxu0 %v1187
      %1189 = vmatprep.subr.mxu0 0.0
      %v1190 = vand.u32 %v251, 4294901760
      %v1191 = vsub.f32 %v251, %v1190
      %v1192 = vand.u32 %v1191, 4294901760
      %1193 = vmatpush1.msra.mxu0 %v1192
      %1194 = vmatprep.subr.mxu0 0.0
      %v1195 = vand.u32 %v252, 4294901760
      %v1196 = vsub.f32 %v252, %v1195
      %v1197 = vand.u32 %v1196, 4294901760
      %1198 = vmatpush1.msra.mxu0 %v1197
      %1199 = vmatprep.subr.mxu0 0.0
      %v1200 = vand.u32 %v253, 4294901760
      %v1201 = vsub.f32 %v253, %v1200
      %v1202 = vand.u32 %v1201, 4294901760
      %1203 = vmatpush1.msra.mxu0 %v1202
      %1204 = vmatprep.subr.mxu0 0.0
      %v1205 = vand.u32 %v254, 4294901760
      %v1206 = vsub.f32 %v254, %v1205
      %v1207 = vand.u32 %v1206, 4294901760
      %1208 = vmatpush1.msra.mxu0 %v1207
      %1209 = vmatprep.subr.mxu0 0.0
      %1210 = vmatpush1.msra.mxu0 0.0
      %1211 = vmatprep.subr.mxu0 0.0
      %1212 = vmatpush1.msra.mxu0 0.0
      %1213 = vmatprep.subr.mxu0 0.0
      %1214 = vmatpush1.msra.mxu0 0.0
      %1215 = vmatprep.subr.mxu0 0.0
      %1216 = vmatpush1.msra.mxu0 0.0
      %1217 = vmatprep.subr.mxu0 0.0
      %1218 = vmatpush1.msra.mxu0 0.0
      %1219 = vmatprep.subr.mxu0 0.0
      %1220 = vmatpush1.msra.mxu0 0.0
      %1221 = vmatprep.subr.mxu0 0.0
      %1222 = vmatpush1.msra.mxu0 0.0
      %1223 = vmatprep.subr.mxu0 0.0
      %1224 = vmatpush1.msra.mxu0 0.0
      %1225 = vmatprep.subr.mxu0 0.0
      %1226 = vmatpush1.msra.mxu0 0.0
      %1227 = vmatprep.subr.mxu0 0.0
      %1228 = vmatpush1.msra.mxu0 0.0
      %1229 = vmatprep.subr.mxu0 0.0
      %1230 = vmatpush1.msra.mxu0 0.0
      %1231 = vmatprep.subr.mxu0 0.0
      %1232 = vmatpush1.msra.mxu0 0.0
      %1233 = vmatprep.subr.mxu0 0.0
      %1234 = vmatpush1.msra.mxu0 0.0
      %1235 = vmatprep.subr.mxu0 0.0
      %1236 = vmatpush1.msra.mxu0 0.0
      %1237 = vmatprep.subr.mxu0 0.0
      %1238 = vmatpush1.msra.mxu0 0.0
      %1239 = vmatprep.subr.mxu0 0.0
      %1240 = vmatpush1.msra.mxu0 0.0
      %1241 = vmatprep.subr.mxu0 0.0
      %1242 = vmatpush1.msra.mxu0 0.0
      %1243 = vmatprep.subr.mxu0 0.0
      %1244 = vmatpush1.msra.mxu0 0.0
      %1245 = vmatprep.subr.mxu0 0.0
      %1246 = vmatpush1.msra.mxu0 0.0
      %1247 = vmatprep.subr.mxu0 0.0
      %1248 = vmatpush1.msra.mxu0 0.0
      %1249 = vmatprep.subr.mxu0 0.0
      %1250 = vmatpush1.msra.mxu0 0.0
      %1251 = vmatprep.subr.mxu0 0.0
      %1252 = vmatpush1.msra.mxu0 0.0
      %1253 = vmatprep.subr.mxu0 0.0
      %1254 = vmatpush1.msra.mxu0 0.0
      %1255 = vmatprep.subr.mxu0 0.0
      %1256 = vmatpush1.msra.mxu0 0.0
      %1257 = vmatprep.mubr.f32.mxu0 0.0
      %v1258 = vand.u32 %v804, 4294901760
      %1259 = vmatmul.mubr.f32.gmra.mrb[0].mxu0 %v1258
      %v1260 = vpop.f32.mrb[0].mxu0
      %v1261 = vadd.f32 %v1166, %v1260
      %v1262 = vpop.f32.mrb[0].mxu0
      %1263 = vdwg.mxu0
      %1264 = vmatprep.subr.mxu0 0.0
      %v1265 = vand.u32 %v247, 4294901760
      %1266 = vmatpush1.msra.mxu0 %v1265
      %1267 = vmatprep.subr.mxu0 0.0
      %v1268 = vand.u32 %v248, 4294901760
      %1269 = vmatpush1.msra.mxu0 %v1268
      %1270 = vmatprep.subr.mxu0 0.0
      %v1271 = vand.u32 %v249, 4294901760
      %1272 = vmatpush1.msra.mxu0 %v1271
      %1273 = vmatprep.subr.mxu0 0.0
      %v1274 = vand.u32 %v250, 4294901760
      %1275 = vmatpush1.msra.mxu0 %v1274
      %1276 = vmatprep.subr.mxu0 0.0
      %v1277 = vand.u32 %v251, 4294901760
      %1278 = vmatpush1.msra.mxu0 %v1277
      %1279 = vmatprep.subr.mxu0 0.0
      %v1280 = vand.u32 %v252, 4294901760
      %1281 = vmatpush1.msra.mxu0 %v1280
      %1282 = vmatprep.subr.mxu0 0.0
      %v1283 = vand.u32 %v253, 4294901760
      %1284 = vmatpush1.msra.mxu0 %v1283
      %1285 = vmatprep.subr.mxu0 0.0
      %v1286 = vand.u32 %v254, 4294901760
      %1287 = vmatpush1.msra.mxu0 %v1286
      %1288 = vmatprep.subr.mxu0 0.0
      %1289 = vmatpush1.msra.mxu0 0.0
      %1290 = vmatprep.subr.mxu0 0.0
      %1291 = vmatpush1.msra.mxu0 0.0
      %1292 = vmatprep.subr.mxu0 0.0
      %1293 = vmatpush1.msra.mxu0 0.0
      %1294 = vmatprep.subr.mxu0 0.0
      %1295 = vmatpush1.msra.mxu0 0.0
      %1296 = vmatprep.subr.mxu0 0.0
      %1297 = vmatpush1.msra.mxu0 0.0
      %1298 = vmatprep.subr.mxu0 0.0
      %1299 = vmatpush1.msra.mxu0 0.0
      %1300 = vmatprep.subr.mxu0 0.0
      %1301 = vmatpush1.msra.mxu0 0.0
      %1302 = vmatprep.subr.mxu0 0.0
      %1303 = vmatpush1.msra.mxu0 0.0
      %1304 = vmatprep.subr.mxu0 0.0
      %1305 = vmatpush1.msra.mxu0 0.0
      %1306 = vmatprep.subr.mxu0 0.0
      %1307 = vmatpush1.msra.mxu0 0.0
      %1308 = vmatprep.subr.mxu0 0.0
      %1309 = vmatpush1.msra.mxu0 0.0
      %1310 = vmatprep.subr.mxu0 0.0
      %1311 = vmatpush1.msra.mxu0 0.0
      %1312 = vmatprep.subr.mxu0 0.0
      %1313 = vmatpush1.msra.mxu0 0.0
      %1314 = vmatprep.subr.mxu0 0.0
      %1315 = vmatpush1.msra.mxu0 0.0
      %1316 = vmatprep.subr.mxu0 0.0
      %1317 = vmatpush1.msra.mxu0 0.0
      %1318 = vmatprep.subr.mxu0 0.0
      %1319 = vmatpush1.msra.mxu0 0.0
      %1320 = vmatprep.subr.mxu0 0.0
      %1321 = vmatpush1.msra.mxu0 0.0
      %1322 = vmatprep.subr.mxu0 0.0
      %1323 = vmatpush1.msra.mxu0 0.0
      %1324 = vmatprep.subr.mxu0 0.0
      %1325 = vmatpush1.msra.mxu0 0.0
      %1326 = vmatprep.subr.mxu0 0.0
      %1327 = vmatpush1.msra.mxu0 0.0
      %1328 = vmatprep.subr.mxu0 0.0
      %1329 = vmatpush1.msra.mxu0 0.0
      %1330 = vmatprep.subr.mxu0 0.0
      %1331 = vmatpush1.msra.mxu0 0.0
      %1332 = vmatprep.subr.mxu0 0.0
      %1333 = vmatpush1.msra.mxu0 0.0
      %1334 = vmatprep.subr.mxu0 0.0
      %1335 = vmatpush1.msra.mxu0 0.0
      %1336 = vmatprep.mubr.f32.mxu0 0.0
      %v1337 = vand.u32 %v804, 4294901760
      %1338 = vmatmul.mubr.f32.gmra.mrb[0].mxu0 %v1337
      %v1339 = vpop.f32.mrb[0].mxu0
      %v1340 = vadd.f32 %v1261, %v1339
      %v1341 = vpop.f32.mrb[0].mxu0
      %1342 = vdwg.mxu0
      %v1343 = vadd.f32 %v801, %v1340
      %1344 = vst [vmem:[#allocation3] sm:$0xff] %v1343
      // Predicated region
      $region37: #{normalized_error.1} parent=31 // pred_check
        %p1345 = pneg %p239
      $region38: #{normalized_error.1} parent=31 // pred_check_branch
        %1347 = sbr.rel (%p1345) target = $region40
      $region39: #{normalized_error.1} parent=31 // pred_region
        %v1348 = vld [vmem:[#allocation2] sm:$0xff]
        %v1349 = vrsqrt.pop %v1348
        %v1350 = vmul.f32 %v1348, %v1349
        %vm1351 = vcmp.eq.f32.partialorder %v1348, inf
        %v1352 = vsel %vm1351, %v1348, %v1350
        %vm1353 = vcmp.eq.f32.partialorder %v1348, 0.0
        %v1354 = vand.u32 %v1348, 2147483648
        %v1355 = vsel %vm1353, %v1354, %v1352
        %v1356 = vld [vmem:[#allocation3] sm:$0xff]
        %v1357 = vrsqrt.pop %v1356
        %v1358 = vmul.f32 %v1355, %v1357
        %1359 = vst [vmem:[%s238] sm:$0xff] %v1358
      $region40: #{normalized_error.1} parent=31 // pred_fallthru
        _
      %p1360 = scmp.lt.s32.totalorder %s18, 2
      %s1361 = scalar_select %p1360, %s18, 2
      %s1362 = smul.addr %s1361, 8
      %s1363 = scalar_lea.vmem %s3, %s1362
      // Predicated region
      $region41: #{normalized_error.1} parent=31 // pred_check
        %p1364 = pneg %p126
      $region42: #{normalized_error.1} parent=31 // pred_check_branch
        %1366 = sbr.rel (%p1364) target = $region44
      $region43: #{normalized_error.1} parent=31 // pred_region
        _
      $region44: #{normalized_error.1} parent=31 // pred_fallthru
        _
    $region32: #{normalized_error.1} parent=5 // pred_fallthru
      _
    %p1367 = scmp.le.s32.totalorder 2, %s9
    // Predicated region
    $region45: #{normalized_error.1} parent=5 // pred_check
      %p1368 = pneg %p1367
    $region46: #{normalized_error.1} parent=5 // pred_check_branch
      %1370 = sbr.rel (%p1368) target = $region48
    $region47: #{normalized_error.1} parent=5 // pred_region
      %s1371 = ssub.s32 %s9, 2
      // Predicated region
      $region49: #{normalized_error.1} parent=47 // pred_check
        %p1372 = pneg %p132
      $region50: #{normalized_error.1} parent=47 // pred_check_branch
        %1374 = sbr.rel (%p1372) target = $region52
      $region51: #{normalized_error.1} parent=47 // pred_region
        %p1375 = scmp.lt.s32.totalorder %s20, 2
        %s1376 = scalar_select %p1375, %s20, 2
        %s1377 = smul.addr %s1376, 8
        %s1378 = scalar_lea.vmem %s3, %s1377
      $region52: #{normalized_error.1} parent=47 // pred_fallthru
        _
    $region48: #{normalized_error.1} parent=5 // pred_fallthru
      _
  $region6: #{normalized_error.1} parent=0 // loop_footer
    %s13 = sadd.s32 1, %s9
  $region7: #{normalized_error.1} parent=0 // loop_footer_branch
    %8 = sbr.rel target = $region3
  $region8: #{normalized_error.1} parent=0 // loop_exit
    _

</llo_original>
